<compile_context>
chip_gen: v5e
topology: v5e:2x2
jax: 0.10.0
libtpu: 0.0.40
codegen_flags: <defaults>
</compile_context>

<pallas_src>
import math

import jax
import jax.numpy as jnp
from jax import lax
from jax.experimental import pallas as pl
from jax.experimental.pallas import tpu as pltpu


def _round_up(x, m):
    return ((x + m - 1) // m) * m


def _cdiv(a, b):
    return (a + b - 1) // b


def _tpu_vmem_capacity():
    """Per-TensorCore VMEM capacity (v7x: 64 MiB, v5e/v6e: 128 MiB)."""
    try:
        return int(pltpu.get_tpu_info().vmem_capacity_bytes)
    except Exception:
        return 64 * 1024 * 1024  # conservative fallback: works on every generation


# --------------------------------------------------------------------------- kernels
def _silu_mlp_kernel_single(x_ref, w1_ref, w2_ref, o_ref):
    """grid_k == 1: no accumulation needed, write the output block directly."""
    h = jnp.dot(x_ref[...], w1_ref[...], preferred_element_type=jnp.float32)
    s = h * jax.nn.sigmoid(h)                       # SiLU in f32 (exp on the EUP slot)
    o_ref[...] = jnp.dot(s.astype(w2_ref.dtype), w2_ref[...],
                         preferred_element_type=jnp.float32).astype(o_ref.dtype)


def _silu_mlp_kernel_acc_out(x_ref, w1_ref, w2_ref, o_ref):
    """f32 output: accumulate directly into the resident output block (no scratch)."""
    @pl.when(pl.program_id(1) == 0)
    def _():
        o_ref[...] = jnp.zeros_like(o_ref)

    h = jnp.dot(x_ref[...], w1_ref[...], preferred_element_type=jnp.float32)
    s = h * jax.nn.sigmoid(h)
    o_ref[...] += jnp.dot(s.astype(w2_ref.dtype), w2_ref[...],
                          preferred_element_type=jnp.float32)


def _silu_mlp_kernel_acc_scratch(x_ref, w1_ref, w2_ref, o_ref, acc_ref):
    """Non-f32 output: accumulate in an f32 VMEM scratch, cast on the last k step."""
    k = pl.program_id(1)

    @pl.when(k == 0)
    def _():
        acc_ref[...] = jnp.zeros_like(acc_ref)

    h = jnp.dot(x_ref[...], w1_ref[...], preferred_element_type=jnp.float32)
    s = h * jax.nn.sigmoid(h)
    acc_ref[...] += jnp.dot(s.astype(w2_ref.dtype), w2_ref[...],
                            preferred_element_type=jnp.float32)

    @pl.when(k == pl.num_programs(1) - 1)
    def _():
        o_ref[...] = acc_ref[...].astype(o_ref.dtype)


# --------------------------------------------------------------------------- tiling
def _choose_tiles(M, d_model, d_ff, in_bytes, out_bytes, budget, tm_init, align,
                  use_scratch):
    """Pick (tm, tf) jointly so the double-buffered footprint fits the VMEM budget."""
    tm = _round_up(max(align, min(tm_init, _round_up(M, align))), align)
    while True:
        fixed = (2 * tm * d_model * in_bytes       # x tile (double-buffered)
                 + 2 * tm * d_model * out_bytes)   # out tile (double-buffered)
        if use_scratch:
            fixed += tm * d_model * 4              # f32 accumulator scratch
        per_tf = (4 * d_model * in_bytes           # w1t + w2t tiles, double-buffered
                  + 3 * tm * 4)                    # h / silu(h) / partial f32 temps
        avail = budget - fixed
        if avail >= per_tf * min(d_ff, 128) or tm <= align:
            break
        tm = max(align, _round_up(tm // 2, align))  # shrink rows before shrinking tf

    tf_max = avail // per_tf if avail > 0 else 1
    if tf_max >= d_ff or d_ff <= 128:
        tf = d_ff                                   # small / fully-resident d_ff
    else:
        tf = max(128, (tf_max // 128) * 128)        # 128-lane aligned
        if tf >= 512:
            tf -= tf % 256                          # prefer 256-wide MXU tiles
        tf = min(tf, d_ff)
    return tm, tf


# --------------------------------------------------------------------------- wrapper
def silu_mlp(x, w1, w2, *, tm=None, compute_dtype=None, tf_override=None):
    """out = silu(x @ w1.T) @ w2.T   (matches the PyTorch SiLU module).

    x:  (..., d_model)
    w1: (d_ff, d_model)   PyTorch Linear layout (out, in)
    w2: (d_model, d_ff)
    compute_dtype: e.g. jnp.bfloat16 for MXU-native throughput (f32 accumulation kept;
                   note inputs/weights are then quantized to bf16 before the matmuls).
    """
    d_ff, d_model = w1.shape
    assert w2.shape == (d_model, d_ff)
    out_dtype = x.dtype

    lead_shape = x.shape[:-1]
    M = int(math.prod(lead_shape)) if lead_shape else 1

    cdt = jnp.dtype(compute_dtype) if compute_dtype is not None else jnp.dtype(x.dtype)
    in_bytes = cdt.itemsize
    out_bytes = jnp.dtype(out_dtype).itemsize
    # Sublane packing: f32 -> 8, bf16 -> 16, fp8/int8 -> 32 rows per (8,128) tile.
    align = max(8, 32 // in_bytes)

    cap = _tpu_vmem_capacity()
    budget = min(int(cap * 0.75), 100 * 1024 * 1024)
    two_tc = cap <= 80 * 1024 * 1024                 # 64-MiB VMEM <=> 2 TC/chip (v7x)
    tm_init = tm if tm is not None else (512 if two_tc else 1024)
    if two_tc and M > align:
        # Keep grid_m >= 2 so the "parallel" row axis shards across both TensorCores.
        tm_init = min(tm_init, _round_up(_cdiv(M, 2), align))

    use_scratch = jnp.dtype(out_dtype) != jnp.dtype(jnp.float32)
    tm_eff, tf = _choose_tiles(M, d_model, d_ff, in_bytes, out_bytes, budget,
                               tm_init, align, use_scratch)
    if tf_override is not None:
        tf = min(int(tf_override), d_ff)

    # Canonical (K, N) weight layout, prepared once on the XLA side (no per-tile
    # transposes inside the kernel).  Callers that reuse weights can hoist this.
    x2d = x.reshape(M, d_model).astype(cdt)          # reshape is free; no HBM padding
    w1t = w1.T.astype(cdt)                           # (d_model, d_ff)
    w2t = w2.T.astype(cdt)                           # (d_ff, d_model)

    # Ragged d_ff tail: zero-pad the weights along d_ff (exact: silu(0)=0 and the
    # padded rows of w2t are zero, so padded columns contribute nothing).
    d_ff_pad = _round_up(d_ff, tf) if tf < d_ff else d_ff
    if d_ff_pad != d_ff:
        pad = d_ff_pad - d_ff
        w1t = jnp.pad(w1t, ((0, 0), (0, pad)))
        w2t = jnp.pad(w2t, ((0, pad), (0, 0)))

    grid_m = _cdiv(M, tm_eff)                        # partial last row block is fine:
    grid_k = d_ff_pad // tf                          # rows are independent in both matmuls

    if grid_k == 1:
        kernel = _silu_mlp_kernel_single
        scratch = []
    elif not use_scratch:
        kernel = _silu_mlp_kernel_acc_out            # accumulate into resident o_ref
        scratch = []
    else:
        kernel = _silu_mlp_kernel_acc_scratch
        scratch = [pltpu.VMEM((tm_eff, d_model), jnp.float32)]

    cost = pl.CostEstimate(
        flops=4 * M * d_model * d_ff,                # two matmuls
        transcendentals=M * d_ff,                    # exp in sigmoid
        bytes_accessed=int(in_bytes * (M * d_model + grid_m * 2 * d_model * d_ff_pad)
                           + out_bytes * M * d_model),
    )

    out2d = pl.pallas_call(
        kernel,
        out_shape=jax.ShapeDtypeStruct((M, d_model), out_dtype),
        grid_spec=pltpu.PrefetchScalarGridSpec(
            num_scalar_prefetch=0,
            grid=(grid_m, grid_k),
            in_specs=[
                pl.BlockSpec((tm_eff, d_model), lambda i, k: (i, 0)),   # x rows
                pl.BlockSpec((d_model, tf), lambda i, k: (0, k)),       # w1t d_ff tile
                pl.BlockSpec((tf, d_model), lambda i, k: (k, 0)),       # w2t d_ff tile
            ],
            out_specs=pl.BlockSpec((tm_eff, d_model), lambda i, k: (i, 0)),
            scratch_shapes=scratch,
        ),
        compiler_params=pltpu.CompilerParams(
            dimension_semantics=("parallel", "arbitrary"),
            vmem_limit_bytes=budget,
        ),
        cost_estimate=cost,
    )(x2d, w1t, w2t)

    return out2d.reshape(*lead_shape, d_model)


# --------------------------------------------------------------------------- reference
def init_linear_weight(key, out_features, in_features, dtype=jnp.float32):
    # Matches torch.nn.init.trunc_normal_(mean=0, std=std, a=-3*std, b=3*std)
    std = math.sqrt(2.0 / (out_features + in_features))
    w = jax.random.truncated_normal(
        key, lower=-3.0, upper=3.0, shape=(out_features, in_features)) * std
    return w.astype(dtype)


def silu_mlp_ref(x, w1, w2):
    a1 = jnp.einsum("...i,oi->...o", x, w1, precision=lax.Precision.HIGHEST)
    s = a1 * jax.nn.sigmoid(a1)
    return jnp.einsum("...i,oi->...o", s, w2, precision=lax.Precision.HIGHEST)


if __name__ == "__main__":
    key = jax.random.PRNGKey(0)
    k_x, k_w1, k_w2, k_x2, k_w3, k_w4 = jax.random.split(key, 6)

    # --- Test 1: module-sized small shapes, f32, single-k fast path -----------------
    batch, seq, d_model, d_ff = 2, 8, 32, 64
    x = jax.random.normal(k_x, (batch, seq, d_model), dtype=jnp.float32)
    w1 = init_linear_weight(k_w1, d_ff, d_model)     # (d_ff, d_model)
    w2 = init_linear_weight(k_w2, d_model, d_ff)     # (d_model, d_ff)
    ref = silu_mlp_ref(x, w1, w2)

    out = jax.block_until_ready(silu_mlp(x, w1, w2))
    assert out.shape == (batch, seq, d_model)
    assert jnp.allclose(out, ref, atol=2e-5, rtol=2e-5)

    # --- Test 2: multi-tile d_ff reduction (f32 accumulation in the resident output
    #     block) + ragged d_ff handled by zero-padded weight tiles --------------------
    d_model2, d_ff2 = 128, 192
    x2 = jax.random.normal(k_x2, (batch, seq, d_model2), dtype=jnp.float32)
    w3 = init_linear_weight(k_w3, d_ff2, d_model2)
    w4 = init_linear_weight(k_w4, d_model2, d_ff2)
    ref2 = silu_mlp_ref(x2, w3, w4)

    out2 = jax.block_until_ready(silu_mlp(x2, w3, w4, tf_override=128))
    assert out2.shape == (batch, seq, d_model2)
    assert jnp.allclose(out2, ref2, atol=1e-4, rtol=1e-4)

    # --- Test 3: bf16 inputs/weights -> bf16 output (f32 VMEM scratch accumulator) ---
    out3 = jax.block_until_ready(
        silu_mlp(x2.astype(jnp.bfloat16), w3.astype(jnp.bfloat16),
                 w4.astype(jnp.bfloat16), tf_override=128))
    assert out3.dtype == jnp.bfloat16
    assert jnp.allclose(out3.astype(jnp.float32), ref2, atol=1e-1, rtol=1e-1)

    # --- Test 4: bf16 compute path on f32 inputs (MXU-native, f32 accumulation) ------
    out4 = jax.block_until_ready(silu_mlp(x, w1, w2, compute_dtype=jnp.bfloat16))
    assert out4.shape == (batch, seq, d_model)
    assert jnp.allclose(out4, ref, atol=5e-2, rtol=5e-2)

    print("KERNEL_OK")
</pallas_src>

<mosaic_0001>
module attributes {stable_mosaic.version = 11 : i64} {
  func.func @_silu_mlp_kernel_single(%arg0: i32, %arg1: i32, %arg2: memref<8x32xf32, #tpu.memory_space<vmem>>, %arg3: memref<32x64xf32, #tpu.memory_space<vmem>>, %arg4: memref<64x32xf32, #tpu.memory_space<vmem>>, %arg5: memref<8x32xf32, #tpu.memory_space<vmem>>) attributes {dimension_semantics = [#tpu.dimension_semantics<parallel>, #tpu.dimension_semantics<arbitrary>], iteration_bounds = array<i64: 2, 1>, scalar_prefetch = 0 : i64, scratch_operands = 0 : i64, tpu.core_type = #tpu.core_type<tc>, window_params = [{transform_indices = @transform_0, window_bounds = array<i64: 8, 32>}, {transform_indices = @transform_1, window_bounds = array<i64: 32, 64>}, {transform_indices = @transform_2, window_bounds = array<i64: 64, 32>}, {transform_indices = @transform_3, window_bounds = array<i64: 8, 32>}]} {
    %c0 = arith.constant 0 : index
    %c0_0 = arith.constant 0 : index
    %0 = vector.load %arg2[%c0, %c0_0] : memref<8x32xf32, #tpu.memory_space<vmem>>, vector<8x32xf32>
    %c0_1 = arith.constant 0 : index
    %c0_2 = arith.constant 0 : index
    %1 = vector.load %arg3[%c0_1, %c0_2] : memref<32x64xf32, #tpu.memory_space<vmem>>, vector<32x64xf32>
    %cst = arith.constant dense<0.000000e+00> : vector<8x64xf32>
    %2 = tpu.matmul %0, %1, %cst {dimension_numbers = #tpu.dot_dimension_numbers<[1], [0], [0], [1], [0, 0, 1, 1], [], []>} : vector<8x32xf32>, vector<32x64xf32>, vector<8x64xf32> -> vector<8x64xf32>
    %3 = arith.negf %2 : vector<8x64xf32>
    %4 = math.exp %3 : vector<8x64xf32>
    %cst_3 = arith.constant 1.000000e+00 : f32
    %5 = vector.broadcast %cst_3 : f32 to vector<8x64xf32>
    %6 = arith.addf %5, %4 : vector<8x64xf32>
    %7 = arith.divf %5, %6 : vector<8x64xf32>
    %8 = arith.mulf %2, %7 : vector<8x64xf32>
    %c0_4 = arith.constant 0 : index
    %c0_5 = arith.constant 0 : index
    %9 = vector.load %arg4[%c0_4, %c0_5] : memref<64x32xf32, #tpu.memory_space<vmem>>, vector<64x32xf32>
    %cst_6 = arith.constant dense<0.000000e+00> : vector<8x32xf32>
    %10 = tpu.matmul %8, %9, %cst_6 {dimension_numbers = #tpu.dot_dimension_numbers<[1], [0], [0], [1], [0, 0, 1, 1], [], []>} : vector<8x64xf32>, vector<64x32xf32>, vector<8x32xf32> -> vector<8x32xf32>
    %c0_7 = arith.constant 0 : index
    %c0_8 = arith.constant 0 : index
    %11 = vector.load %arg5[%c0_7, %c0_8] : memref<8x32xf32, #tpu.memory_space<vmem>>, vector<8x32xf32>
    tpu.vector_store %arg5[%c0_7, %c0_8], %10 {strides = array<i32>} : memref<8x32xf32, #tpu.memory_space<vmem>>, vector<8x32xf32>,
    return
  }
  func.func @transform_0(%arg0: i32, %arg1: i32) -> (i32, i32) {
    %c0_i32 = arith.constant 0 : i32
    %c0_i32_0 = arith.constant 0 : i32
    return %arg0, %c0_i32 : i32, i32
  }
  func.func @transform_1(%arg0: i32, %arg1: i32) -> (i32, i32) {
    %c0_i32 = arith.constant 0 : i32
    %c0_i32_0 = arith.constant 0 : i32
    return %c0_i32, %arg1 : i32, i32
  }
  func.func @transform_2(%arg0: i32, %arg1: i32) -> (i32, i32) {
    %c0_i32 = arith.constant 0 : i32
    %c0_i32_0 = arith.constant 0 : i32
    return %arg1, %c0_i32 : i32, i32
  }
  func.func @transform_3(%arg0: i32, %arg1: i32) -> (i32, i32) {
    %c0_i32 = arith.constant 0 : i32
    %c0_i32_0 = arith.constant 0 : i32
    return %arg0, %c0_i32 : i32, i32
  }
}

</mosaic_0001>

<llo_original>
// kernel: tpu_custom_call.1
$region0: #{tpu_custom_call.1}
  #allocation0 [shape = 'u32[]', space=smem, size = 0x4, offset = 0x4, fixed_abs, tag = 'smem constant byte address 0x4 - core index']
  #allocation1 [shape = 'u32[72,128]{1,0:T(1,128)}', space=vmem, size = 0x9000, scoped, tag = 'internal scratch']
  %s0 = inlined_call_operand.vmem [shape: f32[16,32], index: 0, kind: input, shape index: {}]
  %s1 = inlined_call_operand.vmem [shape: f32[32,64], index: 1, kind: input, shape index: {}]
  %s2 = inlined_call_operand.vmem [shape: f32[64,32], index: 2, kind: input, shape index: {}]
  %s3 = inlined_call_operand.hbm [shape: f32[16,32], index: 3, kind: output, shape index: {}]
  %s4 = sld [smem:[#allocation0]]
  $region45: #{tpu_custom_call.1} parent=0
    _
  %s6 = ssub.s32 1, %s4
  %s7 = scalar_select 0, %s6, %s4
  $region1: #{tpu_custom_call.1} parent=0
    #allocation2 [shape = 'u8[8192]{0}', space=vmem, size = 0x2000, scoped, tag = 'output window, operand 0']
    #allocation3 [shape = 's32[2]{0}', space=sflag, size = 0x8, scoped, tag = 'scoped memory for tpu_custom_call.1']
    %8 = vsyncpa [#allocation3], 0
    %s9 = scalar_lea.sflag [#allocation3], 1
    %10 = vsyncpa %s9, 0
    loop: start=0, step=1, limit=4
    $region2: #{tpu_custom_call.1} parent=1 // loop_pre_header
      _
    $region3: #{tpu_custom_call.1} parent=1 // loop_header
      %s12 = sphi 0, %s16
      %p13 = scmp.ge.s32.totalorder %s12, 4
      %s19 = sphi 0, %s31
      %s20 = sphi 0, %s27
      %s21 = sphi 0, %s19
      %s22 = sphi 0, %s20
      %s23 = sphi 0, %s21
      %s24 = sphi 0, %s22
      %s34 = sphi 0, %s36
      %s37 = sphi 0, %s34
      %s38 = sphi 0, %s37
      %s54 = sphi 0, %s38
      %s60 = sphi 0, %s62
      %s63 = sphi 0, %s60
      %s64 = sphi 0, %s63
      %s80 = sphi 0, %s64
      %s86 = sphi 0, %s88
      %s89 = sphi 0, %s86
      %s90 = sphi 0, %s89
      %s106 = sphi 0, %s90
      %s112 = sphi 0, %s114
      %s115 = sphi 0, %s112
      %s116 = sphi 0, %s115
      %s132 = sphi 0, %s116
    $region4: #{tpu_custom_call.1} parent=1 // loop_header_branch
      %15 = sbr.rel (%p13) target = $region8
    $region5: #{tpu_custom_call.1} parent=1 // loop_body
      %s17 = ssub.s32 %s12, 1
      %s18 = ssub.s32 %s12, 2
      %s25 = sadd.s32 1, %s20
      %p26 = scmp.ge.s32.totalorder %s25, 1
      %s27 = scalar_select %p26, 0, %s25
      %s28 = sadd.s32 1, %s19
      %s29 = scalar_select %p26, %s28, %s19
      %p30 = scmp.ge.s32.totalorder %s29, 2
      %s31 = scalar_select %p30, 0, %s29
      %s32 = ssub.s32 %s19, %s31
      %p33 = scmp.eq.s32.totalorder %s32, 0
      %s35 = sadd.s32 %s34, 1
      %s36 = scalar_select %p33, %s34, %s35
      %p39 = pneg %p33
      %p40 = scmp.eq.s32.totalorder %s12, 1
      %p41 = por %p39, %p40
      %p42 = scmp.ne.s32.totalorder %s34, %s37
      %p43 = scmp.eq.s32.totalorder %s12, 0
      %p44 = por %p42, %p43
      %p45 = scmp.ne.s32.totalorder %s34, %s37
      %p46 = scmp.eq.s32.totalorder %s17, 1
      %p47 = por %p45, %p46
      %p48 = scmp.ne.s32.totalorder %s37, %s38
      %p49 = scmp.eq.s32.totalorder %s17, 0
      %p50 = por %p48, %p49
      %p51 = scmp.ne.s32.totalorder %s37, %s38
      %p52 = scmp.eq.s32.totalorder %s18, 1
      %p53 = por %p51, %p52
      %p55 = scmp.ne.s32.totalorder %s38, %s54
      %p56 = scmp.eq.s32.totalorder %s18, 0
      %p57 = por %p55, %p56
      %s58 = ssub.s32 %s20, %s27
      %p59 = scmp.eq.s32.totalorder %s58, 0
      %s61 = sadd.s32 %s60, 1
      %s62 = scalar_select %p59, %s60, %s61
      %p65 = pneg %p59
      %p66 = scmp.eq.s32.totalorder %s12, 1
      %p67 = por %p65, %p66
      %p68 = scmp.ne.s32.totalorder %s60, %s63
      %p69 = scmp.eq.s32.totalorder %s12, 0
      %p70 = por %p68, %p69
      %p71 = scmp.ne.s32.totalorder %s60, %s63
      %p72 = scmp.eq.s32.totalorder %s17, 1
      %p73 = por %p71, %p72
      %p74 = scmp.ne.s32.totalorder %s63, %s64
      %p75 = scmp.eq.s32.totalorder %s17, 0
      %p76 = por %p74, %p75
      %p77 = scmp.ne.s32.totalorder %s63, %s64
      %p78 = scmp.eq.s32.totalorder %s18, 1
      %p79 = por %p77, %p78
      %p81 = scmp.ne.s32.totalorder %s64, %s80
      %p82 = scmp.eq.s32.totalorder %s18, 0
      %p83 = por %p81, %p82
      %s84 = ssub.s32 %s20, %s27
      %p85 = scmp.eq.s32.totalorder %s84, 0
      %s87 = sadd.s32 %s86, 1
      %s88 = scalar_select %p85, %s86, %s87
      %p91 = pneg %p85
      %p92 = scmp.eq.s32.totalorder %s12, 1
      %p93 = por %p91, %p92
      %p94 = scmp.ne.s32.totalorder %s86, %s89
      %p95 = scmp.eq.s32.totalorder %s12, 0
      %p96 = por %p94, %p95
      %p97 = scmp.ne.s32.totalorder %s86, %s89
      %p98 = scmp.eq.s32.totalorder %s17, 1
      %p99 = por %p97, %p98
      %p100 = scmp.ne.s32.totalorder %s89, %s90
      %p101 = scmp.eq.s32.totalorder %s17, 0
      %p102 = por %p100, %p101
      %p103 = scmp.ne.s32.totalorder %s89, %s90
      %p104 = scmp.eq.s32.totalorder %s18, 1
      %p105 = por %p103, %p104
      %p107 = scmp.ne.s32.totalorder %s90, %s106
      %p108 = scmp.eq.s32.totalorder %s18, 0
      %p109 = por %p107, %p108
      %s110 = ssub.s32 %s19, %s31
      %p111 = scmp.eq.s32.totalorder %s110, 0
      %s113 = sadd.s32 %s112, 1
      %s114 = scalar_select %p111, %s112, %s113
      %p117 = pneg %p111
      %p118 = scmp.eq.s32.totalorder %s12, 1
      %p119 = por %p117, %p118
      %p120 = scmp.ne.s32.totalorder %s112, %s115
      %p121 = scmp.eq.s32.totalorder %s12, 0
      %p122 = por %p120, %p121
      %p123 = scmp.ne.s32.totalorder %s112, %s115
      %p124 = scmp.eq.s32.totalorder %s17, 1
      %p125 = por %p123, %p124
      %p126 = scmp.ne.s32.totalorder %s115, %s116
      %p127 = scmp.eq.s32.totalorder %s17, 0
      %p128 = por %p126, %p127
      %p129 = scmp.ne.s32.totalorder %s115, %s116
      %p130 = scmp.eq.s32.totalorder %s18, 1
      %p131 = por %p129, %p130
      %p133 = scmp.ne.s32.totalorder %s116, %s132
      %p134 = scmp.eq.s32.totalorder %s18, 0
      %p135 = por %p133, %p134
      %p136 = scmp.le.s32.totalorder 1, %s12
      %p137 = scmp.lt.s32.totalorder %s12, 3
      %p138 = pnand %p136, %p137
      %p139 = pneg %p138
      // Predicated region
      $region9: #{tpu_custom_call.1} parent=5 // pred_check
        _
      $region10: #{tpu_custom_call.1} parent=5 // pred_check_branch
        %141 = sbr.rel (%p138) target = $region12
      $region11: #{tpu_custom_call.1} parent=5 // pred_region
        %s142 = ssub.s32 %s12, 1
        // Predicated region
        $region13: #{tpu_custom_call.1} parent=11 // pred_check
          %p143 = pneg %p76
        $region14: #{tpu_custom_call.1} parent=11 // pred_check_branch
          %145 = sbr.rel (%p143) target = $region16
        $region15: #{tpu_custom_call.1} parent=11 // pred_region
          %p146 = scmp.lt.s32.totalorder %s22, 0
          %s147 = scalar_select %p146, %s22, 0
          %s148 = smul.addr %s147, 8
          %s149 = scalar_lea.vmem %s1, %s148
        $region16: #{tpu_custom_call.1} parent=11 // pred_fallthru
          _
        // Predicated region
        $region17: #{tpu_custom_call.1} parent=11 // pred_check
          %p150 = pneg %p102
        $region18: #{tpu_custom_call.1} parent=11 // pred_check_branch
          %152 = sbr.rel (%p150) target = $region20
        $region19: #{tpu_custom_call.1} parent=11 // pred_region
          %s153 = smul.u32 8, %s22
          %p154 = scmp.lt.s32.totalorder %s153, 7
          %s155 = scalar_select %p154, %s153, 7
          %s156 = smul.addr %s155, 8
          %s157 = scalar_lea.vmem %s2, %s156
          %s158 = smul.u32 8, %s22
        $region20: #{tpu_custom_call.1} parent=11 // pred_fallthru
          _
      $region12: #{tpu_custom_call.1} parent=5 // pred_fallthru
        _
      %p159 = scmp.lt.s32.totalorder %s12, 2
      // Predicated region
      $region21: #{tpu_custom_call.1} parent=5 // pred_check
        %p160 = pneg %p159
      $region22: #{tpu_custom_call.1} parent=5 // pred_check_branch
        %162 = sbr.rel (%p160) target = $region24
      $region23: #{tpu_custom_call.1} parent=5 // pred_region
        // Predicated region
        $region25: #{tpu_custom_call.1} parent=23 // pred_check
          %p163 = pneg %p44
        $region26: #{tpu_custom_call.1} parent=23 // pred_check_branch
          %165 = sbr.rel (%p163) target = $region28
        $region27: #{tpu_custom_call.1} parent=23 // pred_region
          %p166 = scmp.lt.s32.totalorder %s19, 1
          %s167 = scalar_select %p166, %s19, 1
          %s168 = smul.addr %s167, 8
          %s169 = scalar_lea.vmem %s0, %s168
        $region28: #{tpu_custom_call.1} parent=23 // pred_fallthru
          _
      $region24: #{tpu_custom_call.1} parent=5 // pred_fallthru
        _
      %p170 = scmp.le.s32.totalorder 1, %s12
      %p171 = scmp.lt.s32.totalorder %s12, 3
      %p172 = pnand %p170, %p171
      %p173 = pneg %p172
      // Predicated region
      $region29: #{tpu_custom_call.1} parent=5 // pred_check
        _
      $region30: #{tpu_custom_call.1} parent=5 // pred_check_branch
        %175 = sbr.rel (%p172) target = $region32
      $region31: #{tpu_custom_call.1} parent=5 // pred_region
        %s176 = ssub.s32 %s12, 1
        %p177 = scmp.lt.s32.totalorder %s21, 1
        %s178 = scalar_select %p177, %s21, 1
        %s179 = smul.addr %s178, 8
        %s180 = scalar_lea.vmem %s0, %s179
        %p181 = pneg %p50
        %p182 = pneg %p47
        %p183 = scmp.lt.s32.totalorder %s22, 0
        %s184 = scalar_select %p183, %s22, 0
        %s185 = smul.addr %s184, 8
        %s186 = scalar_lea.vmem %s1, %s185
        %p187 = pneg %p76
        %p188 = pneg %p73
        %s189 = smul.u32 8, %s22
        %p190 = scmp.lt.s32.totalorder %s189, 7
        %s191 = scalar_select %p190, %s189, 7
        %s192 = smul.addr %s191, 8
        %s193 = scalar_lea.vmem %s2, %s192
        %p194 = pneg %p102
        %p195 = pneg %p99
        %p196 = pneg %p128
        %p197 = pneg %p125
        %s198 = sand.u32 %s115, 1
        %s199 = scalar_lea.sflag [#allocation3], %s198
        %s200 = sand.u32 %s115, 1
        %s201 = smul.addr %s200, 8
        %s202 = scalar_lea.vmem [#allocation2], %s201
        %p203 = scmp.lt.s32.totalorder %s21, 1
        %s204 = scalar_select %p203, %s21, 1
        %s205 = smul.addr %s204, 8
        %s206 = scalar_lea.vmem %s0, %s205
        %p207 = scmp.lt.s32.totalorder %s22, 0
        %s208 = scalar_select %p207, %s22, 0
        %s209 = smul.addr %s208, 8
        %s210 = scalar_lea.vmem %s1, %s209
        %s211 = smul.u32 8, %s22
        %p212 = scmp.lt.s32.totalorder %s211, 7
        %s213 = scalar_select %p212, %s211, 7
        %s214 = smul.addr %s213, 8
        %s215 = scalar_lea.vmem %s2, %s214
        %s216 = smul.u32 8, %s22
        %v217 = vld [vmem:[%s206] sm:$0xff]
        %v218 = vld [vmem:[%s210] sm:$0xff]
        %v219 = vld [vmem:[%s210 + $0x8] sm:$0xff]
        %v220 = vld [vmem:[%s210 + $0x10] sm:$0xff]
        %v221 = vld [vmem:[%s210 + $0x18] sm:$0xff]
        %vm222 = vcmask 261120
        %v224 = vsel %vm222, %v217, 0
        %226 = vmatpush.msra.mxu0 0.0
        %227 = vmatpush.msra.mxu0 0.0
        %228 = vmatpush.msra.mxu0 0.0
        %229 = vmatpush.msra.mxu0 0.0
        %230 = vmatpush.msra.mxu0 0.0
        %231 = vmatpush.msra.mxu0 0.0
        %232 = vmatpush.msra.mxu0 0.0
        %233 = vmatpush.msra.mxu0 0.0
        %234 = vmatpush.msra.mxu0 0.0
        %235 = vmatpush.msra.mxu0 0.0
        %236 = vmatpush.msra.mxu0 0.0
        %237 = vmatpush.msra.mxu0 0.0
        %238 = vmatpush.msra.mxu0 %v221
        %239 = vmatpush.msra.mxu0 %v220
        %240 = vmatpush.msra.mxu0 %v219
        %241 = vmatpush.msra.mxu0 %v218
        %242 = vmatmul.f32.gmra.mxu0 %v224
        %v243 = vpop.f32.mrf.mxu0
        %v244 = vadd.f32 0.0, %v243
        %245 = vdwg.mxu0
        %v246 = vxor.u32 %v244, 2147483648
        %v247 = vmul.f32 %v246, 1.442695
        %v248 = vpow.pop %v247
        %v249 = vadd.f32 %v248, 1.0
        %v250 = vrcp.pop %v249
        %v251 = vmul.f32 %v249, %v250
        %v252 = vsub.f32 1.0, %v251
        %v253 = vmul.f32 %v250, %v252
        %v254 = vadd.f32 %v250, %v253
        %vm255 = vweird.f32 %v249
        %vm256 = vweird.f32 %v250
        %vm257 = vmor %vm255, %vm256
        %v258 = vsel %vm257, %v250, %v254
        %v259 = vand.u32 2147483647, %v249
        %vm260 = vcmp.eq.f32.partialorder %v259, 8.507059e+37
        %v261 = vand.u32 %v249, 2147483648
        %v262 = vor.u32 1.1754944e-38, %v261
        %v263 = vsel %vm260, %v262, %v258
        %v264 = vmul.f32 1.0, %v263
        %v265 = vmul.f32 %v244, %v264
        %v266 = vld [vmem:[%s215] sm:$0xff]
        %v267 = vld [vmem:[%s215 + $0x8] sm:$0xff]
        %v268 = vld [vmem:[%s215 + $0x10] sm:$0xff]
        %v269 = vld [vmem:[%s215 + $0x18] sm:$0xff]
        %v270 = vld [vmem:[%s215 + $0x20] sm:$0xff]
        %v271 = vld [vmem:[%s215 + $0x28] sm:$0xff]
        %v272 = vld [vmem:[%s215 + $0x30] sm:$0xff]
        %v273 = vld [vmem:[%s215 + $0x38] sm:$0xff]
        %vm274 = vcmask 523264
        %v276 = vsel %vm274, %v265, 0
        %278 = vmatpush.msra.mxu0 0.0
        %279 = vmatpush.msra.mxu0 0.0
        %280 = vmatpush.msra.mxu0 0.0
        %281 = vmatpush.msra.mxu0 0.0
        %282 = vmatpush.msra.mxu0 0.0
        %283 = vmatpush.msra.mxu0 0.0
        %284 = vmatpush.msra.mxu0 0.0
        %285 = vmatpush.msra.mxu0 0.0
        %286 = vmatpush.msra.mxu0 %v273
        %287 = vmatpush.msra.mxu0 %v272
        %288 = vmatpush.msra.mxu0 %v271
        %289 = vmatpush.msra.mxu0 %v270
        %290 = vmatpush.msra.mxu0 %v269
        %291 = vmatpush.msra.mxu0 %v268
        %292 = vmatpush.msra.mxu0 %v267
        %293 = vmatpush.msra.mxu0 %v266
        %294 = vmatmul.f32.gmra.mxu0 %v276
        %v295 = vpop.f32.mrf.mxu0
        %v296 = vadd.f32 0.0, %v295
        %297 = vdwg.mxu0
        %298 = vst.msk [vmem:[%s202] sm:$0xff] %vm222, %v296
        %s299 = sand.u32 %s115, 1
        %s300 = scalar_lea.sflag [#allocation3], %s299
        %s301 = sand.u32 %s115, 1
        %s302 = smul.addr %s301, 8
        %s303 = scalar_lea.vmem [#allocation2], %s302
        // Predicated region
        $region33: #{tpu_custom_call.1} parent=31 // pred_check
          %p304 = pneg %p125
        $region34: #{tpu_custom_call.1} parent=31 // pred_check_branch
          %306 = sbr.rel (%p304) target = $region36
        $region35: #{tpu_custom_call.1} parent=31 // pred_region
          %308 = vsyncadd %s300, 0
          %s309 = smul.addr %s21, 8
          %s310 = scalar_lea.hbm %s3, %s309
          %s312 = sshll.u32 %s303, 4
          %s313 = int_to_ptr.vmem [resolvable:$true] %s312
          %s314 = sshll.u32 %s310, 4
          %s315 = int_to_ptr.hbm [resolvable:$true] %s314
          %317 = dma.vmem_to_hbm [thread:$0]  %s313, 128, %s315, %s300
        $region36: #{tpu_custom_call.1} parent=31 // pred_fallthru
          _
      $region32: #{tpu_custom_call.1} parent=5 // pred_fallthru
        _
      %p318 = scmp.le.s32.totalorder 2, %s12
      // Predicated region
      $region37: #{tpu_custom_call.1} parent=5 // pred_check
        %p319 = pneg %p318
      $region38: #{tpu_custom_call.1} parent=5 // pred_check_branch
        %321 = sbr.rel (%p319) target = $region40
      $region39: #{tpu_custom_call.1} parent=5 // pred_region
        %s322 = ssub.s32 %s12, 2
        // Predicated region
        $region41: #{tpu_custom_call.1} parent=39 // pred_check
          %p323 = pneg %p131
        $region42: #{tpu_custom_call.1} parent=39 // pred_check_branch
          %325 = sbr.rel (%p323) target = $region44
        $region43: #{tpu_custom_call.1} parent=39 // pred_region
          %s326 = sand.u32 %s116, 1
          %s327 = scalar_lea.sflag [#allocation3], %s326
          %s328 = sand.u32 %s116, 1
          %s329 = smul.addr %s328, 8
          %s330 = scalar_lea.vmem [#allocation2], %s329
          %332 = dma.done %s327, 128
        $region44: #{tpu_custom_call.1} parent=39 // pred_fallthru
          _
      $region40: #{tpu_custom_call.1} parent=5 // pred_fallthru
        _
    $region6: #{tpu_custom_call.1} parent=1 // loop_footer
      %s16 = sadd.s32 1, %s12
    $region7: #{tpu_custom_call.1} parent=1 // loop_footer_branch
      %11 = sbr.rel target = $region3
    $region8: #{tpu_custom_call.1} parent=1 // loop_exit
      _
    %333 = vsyncpa [#allocation3], 1
    %s334 = scalar_lea.sflag [#allocation3], 1
    %335 = vsyncpa %s334, 1

</llo_original>
